<compile_context>
chip_gen: v5e
topology: v5e:2x2
jax: 0.10.0
libtpu: 0.0.40
codegen_flags: <defaults>
</compile_context>

<pallas_src>
import math
from functools import partial

import jax
import jax.numpy as jnp
from jax import lax
from jax.experimental import pallas as pl
from jax.experimental.pallas import tpu as pltpu


# ----------------------------- tiling helpers ------------------------------

def _rup(x, m):
    return (x + m - 1) // m * m


def _sublane_multiple(itemsize):
    # Native second-minor tiling: f32 -> 8, bf16 -> 16, int8/fp8 -> 32.
    return {4: 8, 2: 16, 1: 32}.get(int(itemsize), 8)


def _vmem_hard_cap():
    """Chip-aware VMEM limit with headroom for Mosaic internal scratch."""
    cap_phys = 128 << 20
    try:
        info = pltpu.get_tpu_info()
        cap_phys = int(getattr(info, "vmem_capacity_bytes", cap_phys))
    except Exception:
        pass
    # v7x: 64 MiB physical -> ~52 MiB; v5e/v6e: 128 MiB physical -> 100 MiB.
    return int(max(16 << 20, min(cap_phys - (12 << 20), 100 << 20)))


def _choose_tile_b(B):
    """Batch tile: multiple of 8 dividing B; >= 2 blocks when B >= 16 so the
    'parallel' grid axis can be split across v7x's two TensorCores."""
    if B % 8 != 0:
        return B  # block == full array dim is always legal
    cap = 256
    if B >= 16:
        cap = min(cap, (B // 2 // 8) * 8)
    start = (min(cap, B) // 8) * 8
    for tb in range(start, 7, -8):
        if B % tb == 0:
            return tb
    return B


def _choose_tile_n(num_m, tb, N, D, itemsize, subl, budget_bytes):
    """Largest N tile (multiple of the dtype sublane unit) keeping the
    double-buffered input blocks within budget."""
    row_bytes = 2 * num_m * tb * _rup(D, 128) * itemsize  # per token row, x2 buffers
    max_rows = budget_bytes // max(row_bytes, 1)
    if N <= max_rows:
        return N
    tn = (max_rows // subl) * subl
    return max(subl, int(tn))


def _vmem_limit_bytes(num_m, tb, tn, D, itemsize, subl, hard_cap):
    in_bytes = 2 * num_m * tb * _rup(tn, subl) * _rup(D, 128) * itemsize  # x tiles, x2 buf
    w_bytes = 2 * num_m * _rup(D, 8) * 128 * 4                            # (D, 2) weights
    out_bytes = 2 * num_m * _rup(tb, 8) * 128 * 4                          # (M, tb, 2) output
    acc_bytes = num_m * _rup(tb, 8) * 128 * 4                              # (M, tb, 2) scratch
    total = in_bytes + w_bytes + out_bytes + acc_bytes + (2 << 20)         # + slack
    return int(min(max(total, 16 << 20), hard_cap))


def _maybe_pack_lanes(xs, ws, N, D):
    """For D < 128, fold g tokens into the lane dim: (B,N,D)->(B,N/g,g*D) and
    tile the (D,2) weight to (g*D,2).  sum-then-matmul result is identical."""
    if D >= 128:
        return xs, ws, N, D
    g_target = 128 // D
    g = 1
    for cand in range(min(g_target, N), 1, -1):
        if N % cand == 0:
            g = cand
            break
    if g <= 1:
        return xs, ws, N, D
    B = xs[0].shape[0]
    xs = tuple(x.reshape(B, N // g, g * D) for x in xs)   # free (contiguous) reshape
    ws = tuple(jnp.tile(w, (g, 1)) for w in ws)
    return xs, ws, N // g, g * D


# --------------------------------- kernel ----------------------------------

def _make_kernel(num_m, tn, n_tokens, needs_mask):
    """Fused kernel for `num_m` heads.

    Per grid step: widening token-sum of each (tb, tn, D) tile, then a tiny
    (tb, D) @ (D, 2) matmul accumulated into a (num_m, tb, 2) f32 scratch.
    Ragged last N-tile is masked with an iota compare (static remainder).
    """
    rem = n_tokens % tn  # static; > 0 iff needs_mask

    def kernel(*refs):
        x_refs = refs[:num_m]                 # each (tb, tn, D)
        w_refs = refs[num_m:2 * num_m]        # each (D, 2), already scaled by 1/N
        o_ref = refs[2 * num_m]               # (num_m, tb, 2)
        acc_ref = refs[2 * num_m + 1]         # (num_m, tb, 2) f32 scratch

        k = pl.program_id(1)
        last = pl.num_programs(1) - 1

        @pl.when(k == 0)
        def _init():
            acc_ref[...] = jnp.zeros_like(acc_ref)

        def accumulate(masked):
            for m in range(num_m):
                x = x_refs[m][...]
                if masked:
                    tok = lax.broadcasted_iota(jnp.int32, x.shape, 1)
                    x = jnp.where(tok < rem, x, jnp.zeros_like(x))
                # Widening reduction: no full-size f32 temp for bf16 inputs.
                partial = jnp.sum(x, axis=1, dtype=jnp.float32)         # (tb, D)
                acc_ref[m] += jnp.dot(partial, w_refs[m][...],
                                      preferred_element_type=jnp.float32)

        if needs_mask:
            @pl.when(k != last)
            def _full_tiles():
                accumulate(False)

            @pl.when(k == last)
            def _ragged_tile():
                accumulate(True)
        else:
            accumulate(False)

        @pl.when(k == last)
        def _finalize():
            o_ref[...] = acc_ref[...].astype(o_ref.dtype)

    return kernel


def fused_mean_linear(xs, ws, bs, *, tile_n=None, pack_lanes=True,
                      input_budget_bytes=None):
    """Fused mean(axis=1) + Linear(D -> 2) for several heads in ONE pallas_call.

    xs: tuple of M arrays, each (B, N, D)   (fp32 or bf16)
    ws: tuple of M arrays, each (D, 2)      (transposed nn.Linear weight)
    bs: (M, 2) biases
    returns (M, B, 2) float32
    """
    num_m = len(xs)
    B, N, D = xs[0].shape
    itemsize = int(jnp.dtype(xs[0].dtype).itemsize)
    subl = _sublane_multiple(itemsize)

    # Fold the 1/N mean into the weights (uses the ORIGINAL N).
    inv_n = 1.0 / float(N)
    ws = tuple(jnp.asarray(w, jnp.float32) * inv_n for w in ws)

    # Lane-dense packing for narrow D (no HBM copy: contiguous reshape).
    if pack_lanes:
        xs, ws, N, D = _maybe_pack_lanes(xs, ws, N, D)

    tb = _choose_tile_b(B)
    hard_cap = _vmem_hard_cap()
    if input_budget_bytes is None:
        input_budget_bytes = min(hard_cap // 2, 48 << 20)

    if tile_n is None:
        tn = _choose_tile_n(num_m, tb, N, D, itemsize, subl, input_budget_bytes)
    else:
        tn = min(int(tile_n), N)
        if tn != N and tn % subl != 0:
            raise ValueError(
                f"tile_n must equal N or be a multiple of {subl} for "
                f"{jnp.dtype(xs[0].dtype).name} inputs")

    num_k = int(pl.cdiv(N, tn))
    num_b = B // tb
    needs_mask = (N % tn) != 0   # ragged last tile -> masked in-kernel (no jnp.pad)

    in_specs = (
        [pl.BlockSpec((tb, tn, D), lambda b, k: (b, k, 0)) for _ in range(num_m)]
        + [pl.BlockSpec((D, 2), lambda b, k: (0, 0)) for _ in range(num_m)]
    )

    out = pl.pallas_call(
        _make_kernel(num_m, tn, N, needs_mask),
        out_shape=jax.ShapeDtypeStruct((num_m, B, 2), jnp.float32),
        grid_spec=pltpu.PrefetchScalarGridSpec(
            num_scalar_prefetch=0,
            grid=(num_b, num_k),
            in_specs=in_specs,
            out_specs=pl.BlockSpec((num_m, tb, 2), lambda b, k: (0, b, 0)),
            scratch_shapes=[pltpu.VMEM((num_m, tb, 2), jnp.float32)],
        ),
        compiler_params=pltpu.CompilerParams(
            dimension_semantics=("parallel", "arbitrary"),
            vmem_limit_bytes=_vmem_limit_bytes(num_m, tb, tn, D, itemsize,
                                               subl, hard_cap),
        ),
    )(*xs, *ws)

    # Bias stays out of the kernel (no padded (8,128) VMEM tile for 2 floats).
    return out + jnp.asarray(bs, jnp.float32)[:, None, :]


# ------------------------- jitted forward wrappers --------------------------

@partial(jax.jit, static_argnames=("use_embed",))
def _domain_forward(log, metric, trace, ws, bs, *, use_embed):
    bn = log.shape[0]
    if use_embed:
        xs = tuple(x.reshape(bn, x.shape[1], -1) for x in (log, metric, trace))
    else:
        xs = (log, metric, trace)
    return fused_mean_linear(xs, ws, bs)


@jax.jit
def _fusion_forward_impl(x, w_t, b):
    return fused_mean_linear((x,), (w_t,), b[None, :])[0]


# ------------------------------ module params -------------------------------

def _init_linear(key, in_features, out_features=2):
    """Deterministic PyTorch-style nn.Linear init; returns (W^T (D,2), bias (2,))."""
    kw, kb = jax.random.split(key)
    bound = 1.0 / math.sqrt(in_features)
    w = jax.random.uniform(kw, (out_features, in_features), jnp.float32, -bound, bound)
    b = jax.random.uniform(kb, (out_features,), jnp.float32, -bound, bound)
    return w.T, b


class DomainClassifierPallas:
    def __init__(self, key, *, hidden_dim, embed_dim, use_event_number,
                 seq_len, use_embed_domain):
        ks = jax.random.split(key, 7)
        d2 = (embed_dim + use_event_number) * seq_len
        self.log_mlp1 = _init_linear(ks[0], hidden_dim)
        self.metric_mlp1 = _init_linear(ks[1], hidden_dim)
        self.trace_mlp1 = _init_linear(ks[2], hidden_dim)
        self.log_mlp2 = _init_linear(ks[3], d2)
        self.metric_mlp2 = _init_linear(ks[4], d2)
        self.trace_mlp2 = _init_linear(ks[5], d2)
        self.mlp = _init_linear(ks[6], 3 * hidden_dim)   # fusion_forward head
        self.use_embed_domain = use_embed_domain

    def fusion_forward(self, x, constant=1):
        # GRL identity fwd; mean(1) + Linear fused in the Pallas kernel.
        return _fusion_forward_impl(x, self.mlp[0], self.mlp[1])

    def __call__(self, log, metric, trace, constant=1):
        heads = ((self.log_mlp2, self.metric_mlp2, self.trace_mlp2)
                 if self.use_embed_domain else
                 (self.log_mlp1, self.metric_mlp1, self.trace_mlp1))
        ws = tuple(h[0] for h in heads)
        bs = jnp.stack([h[1] for h in heads])
        out = _domain_forward(log, metric, trace, ws, bs,
                              use_embed=self.use_embed_domain)
        return out[0], out[1], out[2]


def _ref_mean_linear(x, w_t, b):
    return jnp.mean(x.astype(jnp.float32), axis=1) @ w_t + b


# ----------------------------------- test -----------------------------------

if __name__ == "__main__":
    key = jax.random.PRNGKey(0)
    k_params, k_log, k_metric, k_trace, k_emb, k_fuse, k_big = jax.random.split(key, 7)

    B, N = 2, 6
    hidden_dim, embed_dim, use_event_number, seq_len = 32, 4, 0, 8

    model = DomainClassifierPallas(
        k_params, hidden_dim=hidden_dim, embed_dim=embed_dim,
        use_event_number=use_event_number, seq_len=seq_len,
        use_embed_domain=False)

    log = jax.random.normal(k_log, (B, N, hidden_dim), jnp.float32)
    metric = jax.random.normal(k_metric, (B, N, hidden_dim), jnp.float32)
    trace = jax.random.normal(k_trace, (B, N, hidden_dim), jnp.float32)

    # mlp1 branch (fused single pallas_call for all three heads, lane-packed).
    log_out, metric_out, trace_out = model(log, metric, trace)
    jax.block_until_ready((log_out, metric_out, trace_out))
    assert jnp.allclose(log_out, _ref_mean_linear(log, *model.log_mlp1), atol=1e-4)
    assert jnp.allclose(metric_out, _ref_mean_linear(metric, *model.metric_mlp1), atol=1e-4)
    assert jnp.allclose(trace_out, _ref_mean_linear(trace, *model.trace_mlp1), atol=1e-4)

    # fusion_forward head (D = 3*hidden, no lane packing).
    xf = jax.random.normal(k_fuse, (B, N, 3 * hidden_dim), jnp.float32)
    fo = model.fusion_forward(xf)
    jax.block_until_ready(fo)
    assert jnp.allclose(fo, _ref_mean_linear(xf, *model.mlp), atol=1e-4)

    # use_embed_domain branch: inputs (B, N, seq_len, embed_dim + use_event_number).
    model.use_embed_domain = True
    x4 = jax.random.normal(k_emb, (B, N, seq_len, embed_dim + use_event_number),
                           jnp.float32)
    lo2, mo2, to2 = model(x4, x4, x4)
    jax.block_until_ready((lo2, mo2, to2))
    ref2 = _ref_mean_linear(x4.reshape(B, N, -1), *model.log_mlp2)
    assert jnp.allclose(lo2, ref2, atol=1e-4)
    assert jnp.allclose(mo2, _ref_mean_linear(x4.reshape(B, N, -1), *model.metric_mlp2),
                        atol=1e-4)

    # Multi-step accumulation + ragged last-tile masking (no jnp.pad):
    # N=12, tile_n=8 -> 2 grid steps, remainder 4 masked in-kernel.
    heads1 = (model.log_mlp1, model.metric_mlp1, model.trace_mlp1)
    ws1 = tuple(h[0] for h in heads1)
    bs1 = jnp.stack([h[1] for h in heads1])
    Nb = 12
    xb = [jax.random.normal(jax.random.fold_in(k_big, i), (B, Nb, hidden_dim),
                            jnp.float32) for i in range(3)]
    out_b = fused_mean_linear(tuple(xb), ws1, bs1, tile_n=8, pack_lanes=False)
    jax.block_until_ready(out_b)
    for i, head in enumerate(heads1):
        assert jnp.allclose(out_b[i], _ref_mean_linear(xb[i], *head), atol=1e-4)

    # bf16 inputs (memory-bound win): dtype-aware tiles (multiple of 16) with a
    # ragged last tile (N=24, tile_n=16 -> remainder 8) and f32 accumulation.
    Nc = 24
    xc = tuple(jax.random.normal(jax.random.fold_in(k_big, 10 + i),
                                 (B, Nc, hidden_dim), jnp.float32).astype(jnp.bfloat16)
               for i in range(3))
    out_bf16 = fused_mean_linear(xc, ws1, bs1, tile_n=16, pack_lanes=False)
    jax.block_until_ready(out_bf16)
    for i, head in enumerate(heads1):
        ref_bf16 = _ref_mean_linear(xc[i].astype(jnp.float32), *head)
        assert jnp.allclose(out_bf16[i], ref_bf16, atol=1e-2)

    print("KERNEL_OK")
</pallas_src>

<mosaic_0001>
module attributes {stable_mosaic.version = 11 : i64} {
  func.func @kernel(%arg0: i32, %arg1: i32, %arg2: memref<2x2x96xf32, #tpu.memory_space<vmem>>, %arg3: memref<2x2x96xf32, #tpu.memory_space<vmem>>, %arg4: memref<2x2x96xf32, #tpu.memory_space<vmem>>, %arg5: memref<96x2xf32, #tpu.memory_space<vmem>>, %arg6: memref<96x2xf32, #tpu.memory_space<vmem>>, %arg7: memref<96x2xf32, #tpu.memory_space<vmem>>, %arg8: memref<3x2x2xf32, #tpu.memory_space<vmem>>, %arg9: memref<3x2x2xf32, #tpu.memory_space<vmem>>) attributes {dimension_semantics = [#tpu.dimension_semantics<parallel>, #tpu.dimension_semantics<arbitrary>], iteration_bounds = array<i64: 1, 1>, scalar_prefetch = 0 : i64, scratch_operands = 1 : i64, tpu.core_type = #tpu.core_type<tc>, window_params = [{transform_indices = @transform_0, window_bounds = array<i64: 2, 2, 96>}, {transform_indices = @transform_1, window_bounds = array<i64: 2, 2, 96>}, {transform_indices = @transform_2, window_bounds = array<i64: 2, 2, 96>}, {pipeline_mode = #tpu.pipeline_mode<synchronous>, transform_indices = @transform_3, window_bounds = array<i64: 96, 2>}, {pipeline_mode = #tpu.pipeline_mode<synchronous>, transform_indices = @transform_4, window_bounds = array<i64: 96, 2>}, {pipeline_mode = #tpu.pipeline_mode<synchronous>, transform_indices = @transform_5, window_bounds = array<i64: 96, 2>}, {transform_indices = @transform_6, window_bounds = array<i64: 3, 2, 2>}]} {
    %c0_i32 = arith.constant 0 : i32
    %0 = arith.cmpi eq, %arg1, %c0_i32 : i32
    %1 = arith.extui %0 : i1 to i32
    %c0_i32_0 = arith.constant 0 : i32
    %2 = arith.cmpi ne, %1, %c0_i32_0 : i32
    scf.if %2 {
      %cst_38 = arith.constant 0.000000e+00 : f32
      %36 = vector.broadcast %cst_38 : f32 to vector<3x2x2xf32>
      %c0_39 = arith.constant 0 : index
      %c0_40 = arith.constant 0 : index
      %c0_41 = arith.constant 0 : index
      %37 = vector.load %arg9[%c0_39, %c0_40, %c0_41] : memref<3x2x2xf32, #tpu.memory_space<vmem>>, vector<3x2x2xf32>
      tpu.vector_store %arg9[%c0_39, %c0_40, %c0_41], %36 {strides = array<i32>} : memref<3x2x2xf32, #tpu.memory_space<vmem>>, vector<3x2x2xf32>,
    } else {
    }
    %c0 = arith.constant 0 : index
    %c0_1 = arith.constant 0 : index
    %c0_2 = arith.constant 0 : index
    %3 = vector.load %arg2[%c0, %c0_1, %c0_2] : memref<2x2x96xf32, #tpu.memory_space<vmem>>, vector<2x2x96xf32>
    %cst = arith.constant dense<0.000000e+00> : vector<2x96xf32>
    %4 = vector.multi_reduction <add>, %3, %cst [1] : vector<2x2x96xf32> to vector<2x96xf32>
    %c0_3 = arith.constant 0 : index
    %c0_4 = arith.constant 0 : index
    %c0_5 = arith.constant 0 : index
    %5 = vector.load %arg9[%c0_3, %c0_4, %c0_5] : memref<3x2x2xf32, #tpu.memory_space<vmem>>, vector<1x2x2xf32>
    %6 = vector.shape_cast %5 : vector<1x2x2xf32> to vector<2x2xf32>
    %c0_6 = arith.constant 0 : index
    %c0_7 = arith.constant 0 : index
    %7 = vector.load %arg5[%c0_6, %c0_7] : memref<96x2xf32, #tpu.memory_space<vmem>>, vector<96x2xf32>
    %cst_8 = arith.constant dense<0.000000e+00> : vector<2x2xf32>
    %8 = tpu.matmul %4, %7, %cst_8 {dimension_numbers = #tpu.dot_dimension_numbers<[1], [0], [0], [1], [0, 0, 1, 1], [], []>} : vector<2x96xf32>, vector<96x2xf32>, vector<2x2xf32> -> vector<2x2xf32>
    %9 = arith.addf %6, %8 : vector<2x2xf32>
    %c0_9 = arith.constant 0 : index
    %c0_10 = arith.constant 0 : index
    %c0_11 = arith.constant 0 : index
    %10 = vector.load %arg9[%c0_9, %c0_10, %c0_11] : memref<3x2x2xf32, #tpu.memory_space<vmem>>, vector<1x2x2xf32>
    %11 = vector.shape_cast %10 : vector<1x2x2xf32> to vector<2x2xf32>
    %12 = vector.shape_cast %9 : vector<2x2xf32> to vector<1x2x2xf32>
    tpu.vector_store %arg9[%c0_9, %c0_10, %c0_11], %12 {strides = array<i32>} : memref<3x2x2xf32, #tpu.memory_space<vmem>>, vector<1x2x2xf32>,
    %c0_12 = arith.constant 0 : index
    %c0_13 = arith.constant 0 : index
    %c0_14 = arith.constant 0 : index
    %13 = vector.load %arg3[%c0_12, %c0_13, %c0_14] : memref<2x2x96xf32, #tpu.memory_space<vmem>>, vector<2x2x96xf32>
    %cst_15 = arith.constant dense<0.000000e+00> : vector<2x96xf32>
    %14 = vector.multi_reduction <add>, %13, %cst_15 [1] : vector<2x2x96xf32> to vector<2x96xf32>
    %c1 = arith.constant 1 : index
    %c0_16 = arith.constant 0 : index
    %c0_17 = arith.constant 0 : index
    %15 = vector.load %arg9[%c1, %c0_16, %c0_17] : memref<3x2x2xf32, #tpu.memory_space<vmem>>, vector<1x2x2xf32>
    %16 = vector.shape_cast %15 : vector<1x2x2xf32> to vector<2x2xf32>
    %c0_18 = arith.constant 0 : index
    %c0_19 = arith.constant 0 : index
    %17 = vector.load %arg6[%c0_18, %c0_19] : memref<96x2xf32, #tpu.memory_space<vmem>>, vector<96x2xf32>
    %cst_20 = arith.constant dense<0.000000e+00> : vector<2x2xf32>
    %18 = tpu.matmul %14, %17, %cst_20 {dimension_numbers = #tpu.dot_dimension_numbers<[1], [0], [0], [1], [0, 0, 1, 1], [], []>} : vector<2x96xf32>, vector<96x2xf32>, vector<2x2xf32> -> vector<2x2xf32>
    %19 = arith.addf %16, %18 : vector<2x2xf32>
    %c1_21 = arith.constant 1 : index
    %c0_22 = arith.constant 0 : index
    %c0_23 = arith.constant 0 : index
    %20 = vector.load %arg9[%c1_21, %c0_22, %c0_23] : memref<3x2x2xf32, #tpu.memory_space<vmem>>, vector<1x2x2xf32>
    %21 = vector.shape_cast %20 : vector<1x2x2xf32> to vector<2x2xf32>
    %22 = vector.shape_cast %19 : vector<2x2xf32> to vector<1x2x2xf32>
    tpu.vector_store %arg9[%c1_21, %c0_22, %c0_23], %22 {strides = array<i32>} : memref<3x2x2xf32, #tpu.memory_space<vmem>>, vector<1x2x2xf32>,
    %c0_24 = arith.constant 0 : index
    %c0_25 = arith.constant 0 : index
    %c0_26 = arith.constant 0 : index
    %23 = vector.load %arg4[%c0_24, %c0_25, %c0_26] : memref<2x2x96xf32, #tpu.memory_space<vmem>>, vector<2x2x96xf32>
    %cst_27 = arith.constant dense<0.000000e+00> : vector<2x96xf32>
    %24 = vector.multi_reduction <add>, %23, %cst_27 [1] : vector<2x2x96xf32> to vector<2x96xf32>
    %c2 = arith.constant 2 : index
    %c0_28 = arith.constant 0 : index
    %c0_29 = arith.constant 0 : index
    %25 = vector.load %arg9[%c2, %c0_28, %c0_29] : memref<3x2x2xf32, #tpu.memory_space<vmem>>, vector<1x2x2xf32>
    %26 = vector.shape_cast %25 : vector<1x2x2xf32> to vector<2x2xf32>
    %c0_30 = arith.constant 0 : index
    %c0_31 = arith.constant 0 : index
    %27 = vector.load %arg7[%c0_30, %c0_31] : memref<96x2xf32, #tpu.memory_space<vmem>>, vector<96x2xf32>
    %cst_32 = arith.constant dense<0.000000e+00> : vector<2x2xf32>
    %28 = tpu.matmul %24, %27, %cst_32 {dimension_numbers = #tpu.dot_dimension_numbers<[1], [0], [0], [1], [0, 0, 1, 1], [], []>} : vector<2x96xf32>, vector<96x2xf32>, vector<2x2xf32> -> vector<2x2xf32>
    %29 = arith.addf %26, %28 : vector<2x2xf32>
    %c2_33 = arith.constant 2 : index
    %c0_34 = arith.constant 0 : index
    %c0_35 = arith.constant 0 : index
    %30 = vector.load %arg9[%c2_33, %c0_34, %c0_35] : memref<3x2x2xf32, #tpu.memory_space<vmem>>, vector<1x2x2xf32>
    %31 = vector.shape_cast %30 : vector<1x2x2xf32> to vector<2x2xf32>
    %32 = vector.shape_cast %29 : vector<2x2xf32> to vector<1x2x2xf32>
    tpu.vector_store %arg9[%c2_33, %c0_34, %c0_35], %32 {strides = array<i32>} : memref<3x2x2xf32, #tpu.memory_space<vmem>>, vector<1x2x2xf32>,
    %c0_i32_36 = arith.constant 0 : i32
    %33 = arith.cmpi eq, %arg1, %c0_i32_36 : i32
    %34 = arith.extui %33 : i1 to i32
    %c0_i32_37 = arith.constant 0 : i32
    %35 = arith.cmpi ne, %34, %c0_i32_37 : i32
    scf.if %35 {
      %c0_38 = arith.constant 0 : index
      %c0_39 = arith.constant 0 : index
      %c0_40 = arith.constant 0 : index
      %36 = vector.load %arg9[%c0_38, %c0_39, %c0_40] : memref<3x2x2xf32, #tpu.memory_space<vmem>>, vector<3x2x2xf32>
      %c0_41 = arith.constant 0 : index
      %c0_42 = arith.constant 0 : index
      %c0_43 = arith.constant 0 : index
      %37 = vector.load %arg8[%c0_41, %c0_42, %c0_43] : memref<3x2x2xf32, #tpu.memory_space<vmem>>, vector<3x2x2xf32>
      tpu.vector_store %arg8[%c0_41, %c0_42, %c0_43], %36 {strides = array<i32>} : memref<3x2x2xf32, #tpu.memory_space<vmem>>, vector<3x2x2xf32>,
    } else {
    }
    return
  }
  func.func @transform_0(%arg0: i32, %arg1: i32) -> (i32, i32, i32) {
    %c0_i32 = arith.constant 0 : i32
    %c0_i32_0 = arith.constant 0 : i32
    return %arg0, %arg1, %c0_i32 : i32, i32, i32
  }
  func.func @transform_1(%arg0: i32, %arg1: i32) -> (i32, i32, i32) {
    %c0_i32 = arith.constant 0 : i32
    %c0_i32_0 = arith.constant 0 : i32
    return %arg0, %arg1, %c0_i32 : i32, i32, i32
  }
  func.func @transform_2(%arg0: i32, %arg1: i32) -> (i32, i32, i32) {
    %c0_i32 = arith.constant 0 : i32
    %c0_i32_0 = arith.constant 0 : i32
    return %arg0, %arg1, %c0_i32 : i32, i32, i32
  }
  func.func @transform_3(%arg0: i32, %arg1: i32) -> (i32, i32) {
    %c0_i32 = arith.constant 0 : i32
    %c0_i32_0 = arith.constant 0 : i32
    %c0_i32_1 = arith.constant 0 : i32
    return %c0_i32, %c0_i32_0 : i32, i32
  }
  func.func @transform_4(%arg0: i32, %arg1: i32) -> (i32, i32) {
    %c0_i32 = arith.constant 0 : i32
    %c0_i32_0 = arith.constant 0 : i32
    %c0_i32_1 = arith.constant 0 : i32
    return %c0_i32, %c0_i32_0 : i32, i32
  }
  func.func @transform_5(%arg0: i32, %arg1: i32) -> (i32, i32) {
    %c0_i32 = arith.constant 0 : i32
    %c0_i32_0 = arith.constant 0 : i32
    %c0_i32_1 = arith.constant 0 : i32
    return %c0_i32, %c0_i32_0 : i32, i32
  }
  func.func @transform_6(%arg0: i32, %arg1: i32) -> (i32, i32, i32) {
    %c0_i32 = arith.constant 0 : i32
    %c0_i32_0 = arith.constant 0 : i32
    %c0_i32_1 = arith.constant 0 : i32
    return %c0_i32, %arg0, %c0_i32_0 : i32, i32, i32
  }
}

</mosaic_0001>

<llo_original>
// kernel: _domain_forward.1
$region0: #{_domain_forward.1}
  #allocation0 [shape = 'u32[]', space=smem, size = 0x4, offset = 0x4, fixed_abs, tag = 'smem constant byte address 0x4 - core index']
  #allocation1 [shape = 'u32[72,128]{1,0:T(1,128)}', space=vmem, size = 0x9000, scoped, tag = 'internal scratch']
  #allocation2 [shape = 'f32[3,2,2]{2,1,0:T(2,128)}', space=vmem, size = 0xc00, scoped, tag = 'scratch operand']
  %s0 = inlined_call_operand.vmem [shape: f32[2,2,96], index: 0, kind: input, shape index: {}]
  %s1 = inlined_call_operand.vmem [shape: f32[2,2,96], index: 1, kind: input, shape index: {}]
  %s2 = inlined_call_operand.vmem [shape: f32[2,2,96], index: 2, kind: input, shape index: {}]
  %s3 = inlined_call_operand.vmem [shape: f32[96,2], index: 3, kind: input, shape index: {}]
  %s4 = inlined_call_operand.vmem [shape: f32[96,2], index: 4, kind: input, shape index: {}]
  %s5 = inlined_call_operand.vmem [shape: f32[96,2], index: 5, kind: input, shape index: {}]
  %s6 = inlined_call_operand.vmem [shape: f32[3,2,2], index: 6, kind: output, shape index: {}]
  %s7 = sld [smem:[#allocation0]]
  $region42: #{_domain_forward.1} parent=0
    _
  %s9 = ssub.s32 1, %s7
  %s10 = scalar_select 0, %s9, %s7
  // Predicated region
  $region2: #{_domain_forward.1} parent=0 // pred_check
    _
  $region3: #{_domain_forward.1} parent=0 // pred_check_branch
    %12 = sbr.rel (0) target = $region5
  $region4: #{_domain_forward.1} parent=0 // pred_region
    _
  $region5: #{_domain_forward.1} parent=0 // pred_fallthru
    _
  // Predicated region
  $region6: #{_domain_forward.1} parent=0 // pred_check
    _
  $region7: #{_domain_forward.1} parent=0 // pred_check_branch
    %14 = sbr.rel (0) target = $region9
  $region8: #{_domain_forward.1} parent=0 // pred_region
    _
  $region9: #{_domain_forward.1} parent=0 // pred_fallthru
    _
  // Predicated region
  $region10: #{_domain_forward.1} parent=0 // pred_check
    _
  $region11: #{_domain_forward.1} parent=0 // pred_check_branch
    %16 = sbr.rel (0) target = $region13
  $region12: #{_domain_forward.1} parent=0 // pred_region
    _
  $region13: #{_domain_forward.1} parent=0 // pred_fallthru
    _
  // Predicated region
  $region14: #{_domain_forward.1} parent=0 // pred_check
    _
  $region15: #{_domain_forward.1} parent=0 // pred_check_branch
    %18 = sbr.rel (0) target = $region17
  $region16: #{_domain_forward.1} parent=0 // pred_region
    _
  $region17: #{_domain_forward.1} parent=0 // pred_fallthru
    _
  // Predicated region
  $region18: #{_domain_forward.1} parent=0 // pred_check
    _
  $region19: #{_domain_forward.1} parent=0 // pred_check_branch
    %20 = sbr.rel (0) target = $region21
  $region20: #{_domain_forward.1} parent=0 // pred_region
    _
  $region21: #{_domain_forward.1} parent=0 // pred_fallthru
    _
  // Predicated region
  $region22: #{_domain_forward.1} parent=0 // pred_check
    _
  $region23: #{_domain_forward.1} parent=0 // pred_check_branch
    %22 = sbr.rel (0) target = $region25
  $region24: #{_domain_forward.1} parent=0 // pred_region
    _
  $region25: #{_domain_forward.1} parent=0 // pred_fallthru
    _
  %p23 = scmp.eq.s32.totalorder 0, 0
  // Predicated region
  $region26: #{_domain_forward.1} parent=0 // pred_check
    %p24 = pneg %p23
  $region27: #{_domain_forward.1} parent=0 // pred_check_branch
    %26 = sbr.rel (%p24) target = $region29
  $region28: #{_domain_forward.1} parent=0 // pred_region
    %vm27 = vcmask 9216
    %28 = vst.msk [vmem:[#allocation2] sm:$0x3] %vm27, 0.0
    %29 = vst.msk [vmem:[#allocation2 + $0x2] sm:$0x3] %vm27, 0.0
    %30 = vst.msk [vmem:[#allocation2 + $0x4] sm:$0x3] %vm27, 0.0
  $region29: #{_domain_forward.1} parent=0 // pred_fallthru
    _
  %v31 = vld [vmem:[%s0] sm:$0x3]
  %v32 = vld [vmem:[%s0 + $0x2] sm:$0x3]
  %vm33 = vcmask 779264
  %v34 = vsel %vm33, %v31, 0.0
  %v35 = vrot.slane %v34, 4
  %v36 = vadd.f32 %v34, %v35
  %v37 = vrot.slane %v36, 2
  %v38 = vadd.f32 %v36, %v37
  %v39 = vrot.slane %v38, 1
  %v40 = vadd.f32 %v38, %v39
  %v41 = vsel %vm33, %v32, 0.0
  %v42 = vrot.slane %v41, 4
  %v43 = vadd.f32 %v41, %v42
  %v44 = vrot.slane %v43, 2
  %v45 = vadd.f32 %v43, %v44
  %v46 = vrot.slane %v45, 1
  %v47 = vadd.f32 %v45, %v46
  %v48 = vld [vmem:[#allocation2] sm:$0x3]
  %v49 = vld [vmem:[%s3] sm:$0xff]
  %v50 = vld [vmem:[%s3 + $0x8] sm:$0xff]
  %v51 = vld [vmem:[%s3 + $0x10] sm:$0xff]
  %v52 = vld [vmem:[%s3 + $0x18] sm:$0xff]
  %v53 = vld [vmem:[%s3 + $0x20] sm:$0xff]
  %v54 = vld [vmem:[%s3 + $0x28] sm:$0xff]
  %v55 = vld [vmem:[%s3 + $0x30] sm:$0xff]
  %v56 = vld [vmem:[%s3 + $0x38] sm:$0xff]
  %v57 = vld [vmem:[%s3 + $0x40] sm:$0xff]
  %v58 = vld [vmem:[%s3 + $0x48] sm:$0xff]
  %v59 = vld [vmem:[%s3 + $0x50] sm:$0xff]
  %v60 = vld [vmem:[%s3 + $0x58] sm:$0xff]
  %vm63 = vcmask 1041409
  %v64 = vsel %vm63, %v47, %v40
  %vm65 = vcmask 785408
  %v66 = vsel %vm65, %v64, 0
  %68 = vmatpush.msra.mxu0 0.0
  %69 = vmatpush.msra.mxu0 0.0
  %70 = vmatpush.msra.mxu0 0.0
  %71 = vmatpush.msra.mxu0 0.0
  %72 = vmatpush.msra.mxu0 %v60
  %73 = vmatpush.msra.mxu0 %v59
  %74 = vmatpush.msra.mxu0 %v58
  %75 = vmatpush.msra.mxu0 %v57
  %76 = vmatpush.msra.mxu0 %v56
  %77 = vmatpush.msra.mxu0 %v55
  %78 = vmatpush.msra.mxu0 %v54
  %79 = vmatpush.msra.mxu0 %v53
  %80 = vmatpush.msra.mxu0 %v52
  %81 = vmatpush.msra.mxu0 %v51
  %82 = vmatpush.msra.mxu0 %v50
  %83 = vmatpush.msra.mxu0 %v49
  %84 = vmatmul.f32.gmra.mxu0 %v66
  %v85 = vpop.f32.mrf.mxu0
  %v86 = vadd.f32 0.0, %v85
  %87 = vdwg.mxu0
  %v88 = vadd.f32 %v48, %v86
  %vm89 = vcmask 9216
  %90 = vst.msk [vmem:[#allocation2] sm:$0x3] %vm89, %v88
  %v91 = vld [vmem:[%s1] sm:$0x3]
  %v92 = vld [vmem:[%s1 + $0x2] sm:$0x3]
  %v93 = vsel %vm33, %v91, 0.0
  %v94 = vrot.slane %v93, 4
  %v95 = vadd.f32 %v93, %v94
  %v96 = vrot.slane %v95, 2
  %v97 = vadd.f32 %v95, %v96
  %v98 = vrot.slane %v97, 1
  %v99 = vadd.f32 %v97, %v98
  %v100 = vsel %vm33, %v92, 0.0
  %v101 = vrot.slane %v100, 4
  %v102 = vadd.f32 %v100, %v101
  %v103 = vrot.slane %v102, 2
  %v104 = vadd.f32 %v102, %v103
  %v105 = vrot.slane %v104, 1
  %v106 = vadd.f32 %v104, %v105
  %s107 = scalar_lea.vmem [#allocation2], 2
  %v108 = vld [vmem:[%s107] sm:$0x3]
  %v109 = vld [vmem:[%s4] sm:$0xff]
  %v110 = vld [vmem:[%s4 + $0x8] sm:$0xff]
  %v111 = vld [vmem:[%s4 + $0x10] sm:$0xff]
  %v112 = vld [vmem:[%s4 + $0x18] sm:$0xff]
  %v113 = vld [vmem:[%s4 + $0x20] sm:$0xff]
  %v114 = vld [vmem:[%s4 + $0x28] sm:$0xff]
  %v115 = vld [vmem:[%s4 + $0x30] sm:$0xff]
  %v116 = vld [vmem:[%s4 + $0x38] sm:$0xff]
  %v117 = vld [vmem:[%s4 + $0x40] sm:$0xff]
  %v118 = vld [vmem:[%s4 + $0x48] sm:$0xff]
  %v119 = vld [vmem:[%s4 + $0x50] sm:$0xff]
  %v120 = vld [vmem:[%s4 + $0x58] sm:$0xff]
  %v123 = vsel %vm63, %v106, %v99
  %v124 = vsel %vm65, %v123, 0
  %126 = vmatpush.msra.mxu0 0.0
  %127 = vmatpush.msra.mxu0 0.0
  %128 = vmatpush.msra.mxu0 0.0
  %129 = vmatpush.msra.mxu0 0.0
  %130 = vmatpush.msra.mxu0 %v120
  %131 = vmatpush.msra.mxu0 %v119
  %132 = vmatpush.msra.mxu0 %v118
  %133 = vmatpush.msra.mxu0 %v117
  %134 = vmatpush.msra.mxu0 %v116
  %135 = vmatpush.msra.mxu0 %v115
  %136 = vmatpush.msra.mxu0 %v114
  %137 = vmatpush.msra.mxu0 %v113
  %138 = vmatpush.msra.mxu0 %v112
  %139 = vmatpush.msra.mxu0 %v111
  %140 = vmatpush.msra.mxu0 %v110
  %141 = vmatpush.msra.mxu0 %v109
  %142 = vmatmul.f32.gmra.mxu0 %v124
  %v143 = vpop.f32.mrf.mxu0
  %v144 = vadd.f32 0.0, %v143
  %145 = vdwg.mxu0
  %v146 = vadd.f32 %v108, %v144
  %147 = vst.msk [vmem:[%s107] sm:$0x3] %vm89, %v146
  %v148 = vld [vmem:[%s2] sm:$0x3]
  %v149 = vld [vmem:[%s2 + $0x2] sm:$0x3]
  %v150 = vsel %vm33, %v148, 0.0
  %v151 = vrot.slane %v150, 4
  %v152 = vadd.f32 %v150, %v151
  %v153 = vrot.slane %v152, 2
  %v154 = vadd.f32 %v152, %v153
  %v155 = vrot.slane %v154, 1
  %v156 = vadd.f32 %v154, %v155
  %v157 = vsel %vm33, %v149, 0.0
  %v158 = vrot.slane %v157, 4
  %v159 = vadd.f32 %v157, %v158
  %v160 = vrot.slane %v159, 2
  %v161 = vadd.f32 %v159, %v160
  %v162 = vrot.slane %v161, 1
  %v163 = vadd.f32 %v161, %v162
  %s164 = scalar_lea.vmem [#allocation2], 4
  %v165 = vld [vmem:[%s164] sm:$0x3]
  %v166 = vld [vmem:[%s5] sm:$0xff]
  %v167 = vld [vmem:[%s5 + $0x8] sm:$0xff]
  %v168 = vld [vmem:[%s5 + $0x10] sm:$0xff]
  %v169 = vld [vmem:[%s5 + $0x18] sm:$0xff]
  %v170 = vld [vmem:[%s5 + $0x20] sm:$0xff]
  %v171 = vld [vmem:[%s5 + $0x28] sm:$0xff]
  %v172 = vld [vmem:[%s5 + $0x30] sm:$0xff]
  %v173 = vld [vmem:[%s5 + $0x38] sm:$0xff]
  %v174 = vld [vmem:[%s5 + $0x40] sm:$0xff]
  %v175 = vld [vmem:[%s5 + $0x48] sm:$0xff]
  %v176 = vld [vmem:[%s5 + $0x50] sm:$0xff]
  %v177 = vld [vmem:[%s5 + $0x58] sm:$0xff]
  %v180 = vsel %vm63, %v163, %v156
  %v181 = vsel %vm65, %v180, 0
  %183 = vmatpush.msra.mxu0 0.0
  %184 = vmatpush.msra.mxu0 0.0
  %185 = vmatpush.msra.mxu0 0.0
  %186 = vmatpush.msra.mxu0 0.0
  %187 = vmatpush.msra.mxu0 %v177
  %188 = vmatpush.msra.mxu0 %v176
  %189 = vmatpush.msra.mxu0 %v175
  %190 = vmatpush.msra.mxu0 %v174
  %191 = vmatpush.msra.mxu0 %v173
  %192 = vmatpush.msra.mxu0 %v172
  %193 = vmatpush.msra.mxu0 %v171
  %194 = vmatpush.msra.mxu0 %v170
  %195 = vmatpush.msra.mxu0 %v169
  %196 = vmatpush.msra.mxu0 %v168
  %197 = vmatpush.msra.mxu0 %v167
  %198 = vmatpush.msra.mxu0 %v166
  %199 = vmatmul.f32.gmra.mxu0 %v181
  %v200 = vpop.f32.mrf.mxu0
  %v201 = vadd.f32 0.0, %v200
  %202 = vdwg.mxu0
  %v203 = vadd.f32 %v165, %v201
  %204 = vst.msk [vmem:[%s164] sm:$0x3] %vm89, %v203
  // Predicated region
  $region30: #{_domain_forward.1} parent=0 // pred_check
    %p205 = pneg %p23
  $region31: #{_domain_forward.1} parent=0 // pred_check_branch
    %207 = sbr.rel (%p205) target = $region33
  $region32: #{_domain_forward.1} parent=0 // pred_region
    %v208 = vld [vmem:[#allocation2] sm:$0x3]
    %v209 = vld [vmem:[#allocation2 + $0x2] sm:$0x3]
    %v210 = vld [vmem:[#allocation2 + $0x4] sm:$0x3]
    %211 = vst.msk [vmem:[%s6] sm:$0x3] %vm89, %v208
    %212 = vst.msk [vmem:[%s6 + $0x2] sm:$0x3] %vm89, %v209
    %213 = vst.msk [vmem:[%s6 + $0x4] sm:$0x3] %vm89, %v210
  $region33: #{_domain_forward.1} parent=0 // pred_fallthru
    _
  // Predicated region
  $region34: #{_domain_forward.1} parent=0 // pred_check
    _
  $region35: #{_domain_forward.1} parent=0 // pred_check_branch
    %215 = sbr.rel (0) target = $region37
  $region36: #{_domain_forward.1} parent=0 // pred_region
    _
  $region37: #{_domain_forward.1} parent=0 // pred_fallthru
    _
  // Predicated region
  $region38: #{_domain_forward.1} parent=0 // pred_check
    _
  $region39: #{_domain_forward.1} parent=0 // pred_check_branch
    %217 = sbr.rel (0) target = $region41
  $region40: #{_domain_forward.1} parent=0 // pred_region
    _
  $region41: #{_domain_forward.1} parent=0 // pred_fallthru
    _

</llo_original>
